<compile_context>
chip_gen: v6e
topology: v6e:2x2x1
jax: 0.10.0
libtpu: 0.0.40
codegen_flags: <defaults>
</compile_context>

<pallas_src>
import jax
import jax.numpy as jnp
from jax.experimental import pallas as pl
from jax.experimental.pallas import tpu as pltpu


# ---------------------------------------------------------------------------
# In-kernel helpers
# ---------------------------------------------------------------------------
def _softmax_lastdim(score):
    # softmax over the last axis of the (S, B) score matrix
    # (== F.softmax(attn_energies, dim=1) in the PyTorch module).
    m = jnp.max(score, axis=-1, keepdims=True)
    e = jnp.exp(score - m)
    denom = jnp.sum(e, axis=-1, keepdims=True)
    # divide -> EUP reciprocal + VPU multiply (keeps the VALU free).
    return e * pl.reciprocal(denom, approx=False)


# ---------------------------------------------------------------------------
# Kernels (all operands are 2D, lane-dense; output is the 2D (S, B) softmax)
# ---------------------------------------------------------------------------
def dot_attn_kernel(hid_ref, enc_ref, bsum_ref, out_ref):
    # hid_ref : (1, B*H)   enc_ref : (S, B*H)   bsum_ref : (B*H, B)   out_ref : (S, B)
    prod = enc_ref[...] * hid_ref[...]                                   # (S, B*H)
    score = jnp.dot(prod, bsum_ref[...],
                    preferred_element_type=jnp.float32)                  # (S, B)
    out_ref[...] = _softmax_lastdim(score)


def general_attn_kernel(hid_ref, enc_ref, wbd_ref, biasbd_ref, bsum_ref, out_ref):
    # hid_ref : (1, B*H)        enc_ref : (S, B*H)
    # wbd_ref : (B*H, B*H)  == kron(I_B, W)            (W is the torch Linear weight)
    # biasbd_ref : (B*H, B) == kron(I_B, bias[:,None])
    # bsum_ref : (B*H, B)   block-sum selector
    #
    # score[s,b] = sum_i enc[s,b,i] * u[b,i] + c[b]
    #   with u = hidden @ W (computed once, B-sized) and c[b] = hidden[b,:] . bias.
    hid = hid_ref[...]                                                   # (1, B*H)
    u = jnp.dot(hid, wbd_ref[...], preferred_element_type=jnp.float32)   # (1, B*H)
    c = jnp.dot(hid, biasbd_ref[...], preferred_element_type=jnp.float32)  # (1, B)
    score = jnp.dot(enc_ref[...] * u, bsum_ref[...],
                    preferred_element_type=jnp.float32) + c              # (S, B)
    out_ref[...] = _softmax_lastdim(score)


def concat_attn_kernel(hid_ref, enc_ref, whbd_ref, webd_ref, biasflat_ref, bsv_ref, out_ref):
    # hid_ref : (1, B*H)    enc_ref : (S, B*H)
    # whbd_ref : (B*H, B*H) == kron(I_B, W[:, :H].T)   (hidden half of the Linear)
    # webd_ref : (B*H, B*H) == kron(I_B, W[:, H:].T)   (encoder half of the Linear)
    # biasflat_ref : (1, B*H) == tile(bias, B)
    # bsv_ref : (B*H, B)    == kron(I_B, v[:,None])    (block-sum selector with v folded in)
    #
    # energy[s,b,:] = tanh(hidden[b] @ Wh^T + enc[s,b] @ We^T + bias)   (no (S,B,2H) concat)
    # score[s,b]    = v . energy[s,b,:]
    hid_part = jnp.dot(hid_ref[...], whbd_ref[...],
                       preferred_element_type=jnp.float32)               # (1, B*H)
    enc_part = jnp.dot(enc_ref[...], webd_ref[...],
                       preferred_element_type=jnp.float32)               # (S, B*H)
    energy = jnp.tanh(enc_part + hid_part + biasflat_ref[...])           # (S, B*H)
    score = jnp.dot(energy, bsv_ref[...],
                    preferred_element_type=jnp.float32)                  # (S, B)
    out_ref[...] = _softmax_lastdim(score)


# ---------------------------------------------------------------------------
# Wrapper (layout plumbing + parameter preprocessing, then one pallas_call)
# ---------------------------------------------------------------------------
def _vmem_spec():
    return pl.BlockSpec(memory_space=pltpu.MemorySpace.VMEM)


def attn_forward(method, hidden, encoder_outputs, params):
    """Pallas version of Attn.forward. Returns (S, 1, B) float32."""
    S, B, H = encoder_outputs.shape
    f32 = jnp.float32

    # Free, contiguous reshapes -> lane-dense 2D operands.
    hid_flat = hidden.reshape(1, B * H).astype(f32)
    enc_flat = encoder_outputs.reshape(S, B * H).astype(f32)

    eye_b = jnp.eye(B, dtype=f32)
    # Block-sum selector: (prod @ bsum)[s, b] = sum_i prod[s, b*H + i]
    bsum = jnp.kron(eye_b, jnp.ones((H, 1), f32))                        # (B*H, B)

    out_shape = jax.ShapeDtypeStruct((S, B), f32)
    vm = _vmem_spec()

    if method == "dot":
        probs = pl.pallas_call(
            dot_attn_kernel,
            out_shape=out_shape,
            in_specs=[vm] * 3,
            out_specs=vm,
        )(hid_flat, enc_flat, bsum)

    elif method == "general":
        w = params["attn_w"].astype(f32)                                  # (H, H) torch weight (out,in)
        b = params["attn_b"].reshape(H).astype(f32)                       # (H,)
        wbd = jnp.kron(eye_b, w)                                          # (B*H, B*H)
        bias_bd = jnp.kron(eye_b, b.reshape(H, 1))                        # (B*H, B)
        probs = pl.pallas_call(
            general_attn_kernel,
            out_shape=out_shape,
            in_specs=[vm] * 5,
            out_specs=vm,
        )(hid_flat, enc_flat, wbd, bias_bd, bsum)

    elif method == "concat":
        w = params["attn_w"].astype(f32)                                  # (H, 2H)
        b = params["attn_b"].reshape(H).astype(f32)                       # (H,)
        v = params["v"].reshape(H).astype(f32)                            # (H,)
        wh_bd = jnp.kron(eye_b, w[:, :H].T)                               # (B*H, B*H)
        we_bd = jnp.kron(eye_b, w[:, H:].T)                               # (B*H, B*H)
        bias_flat = jnp.tile(b, (B,)).reshape(1, B * H)                   # (1, B*H)
        bsv = jnp.kron(eye_b, v.reshape(H, 1))                            # (B*H, B)
        probs = pl.pallas_call(
            concat_attn_kernel,
            out_shape=out_shape,
            in_specs=[vm] * 6,
            out_specs=vm,
        )(hid_flat, enc_flat, wh_bd, we_bd, bias_flat, bsv)

    else:
        raise ValueError(method, "is not an appropriate attention method.")

    # Pure layout plumbing: (S, B) -> (S, 1, B) == softmax(...).unsqueeze(1)
    return probs[:, None, :]


# ---------------------------------------------------------------------------
# Pure-JAX reference (mirrors the PyTorch module exactly, high precision)
# ---------------------------------------------------------------------------
def attn_reference(method, hidden, encoder_outputs, params):
    hp = jax.lax.Precision.HIGHEST
    if method == "dot":
        score = jnp.sum(hidden * encoder_outputs, axis=2)
    elif method == "general":
        w, b = params["attn_w"], params["attn_b"].reshape(-1)
        energy = jnp.einsum("sbi,oi->sbo", encoder_outputs, w, precision=hp) + b
        score = jnp.sum(hidden * energy, axis=2)
    elif method == "concat":
        w, b, v = params["attn_w"], params["attn_b"].reshape(-1), params["v"].reshape(-1)
        hid = jnp.broadcast_to(hidden, encoder_outputs.shape)
        cat = jnp.concatenate([hid, encoder_outputs], axis=2)
        energy = jnp.tanh(jnp.einsum("sbi,oi->sbo", cat, w, precision=hp) + b)
        score = jnp.sum(v * energy, axis=2)
    else:
        raise ValueError(method)
    return jax.nn.softmax(score, axis=1)[:, None, :]


# ---------------------------------------------------------------------------
# Main
# ---------------------------------------------------------------------------
if __name__ == "__main__":
    S, B, H = 8, 2, 32   # seq, batch, hidden_size

    key = jax.random.PRNGKey(0)
    k_hid, k_enc, k_wg, k_bg, k_wc, k_bc, k_v = jax.random.split(key, 7)

    hidden = jax.random.normal(k_hid, (1, B, H), dtype=jnp.float32)
    encoder_outputs = jax.random.normal(k_enc, (S, B, H), dtype=jnp.float32)

    # Deterministic synthetic parameters (shapes per torch.nn.Linear / Parameter)
    params_general = {
        "attn_w": 0.1 * jax.random.normal(k_wg, (H, H), dtype=jnp.float32),
        "attn_b": 0.1 * jax.random.normal(k_bg, (H,), dtype=jnp.float32),
    }
    params_concat = {
        "attn_w": 0.1 * jax.random.normal(k_wc, (H, 2 * H), dtype=jnp.float32),
        "attn_b": 0.1 * jax.random.normal(k_bc, (H,), dtype=jnp.float32),
        "v":      0.1 * jax.random.normal(k_v, (H,), dtype=jnp.float32),
    }
    all_params = {"dot": {}, "general": params_general, "concat": params_concat}

    ok = True
    for method in ["dot", "general", "concat"]:
        out = attn_forward(method, hidden, encoder_outputs, all_params[method])
        out = jax.block_until_ready(out)
        ref = attn_reference(method, hidden, encoder_outputs, all_params[method])
        assert out.shape == (S, 1, B), (method, out.shape)
        # Tolerance accounts for MXU bf16-pass rounding inside the kernel vs. the
        # high-precision XLA reference; softmax outputs are O(1) so 2e-3 still
        # catches any real math error by orders of magnitude.
        if not jnp.allclose(out, ref, atol=2e-3, rtol=2e-3):
            ok = False
            print(f"MISMATCH for method={method}: max abs err "
                  f"{float(jnp.max(jnp.abs(out - ref)))}")

    if ok:
        print("KERNEL_OK")
</pallas_src>

<mosaic_0001>
module attributes {stable_mosaic.version = 11 : i64} {
  func.func @dot_attn_kernel(%arg0: memref<1x64xf32, #tpu.memory_space<vmem>>, %arg1: memref<8x64xf32, #tpu.memory_space<vmem>>, %arg2: memref<64x2xf32, #tpu.memory_space<vmem>>, %arg3: memref<8x2xf32, #tpu.memory_space<vmem>>) attributes {dimension_semantics = [], scalar_prefetch = 0 : i64, scratch_operands = 0 : i64, tpu.core_type = #tpu.core_type<tc>} {
    %c0 = arith.constant 0 : index
    %c0_0 = arith.constant 0 : index
    %0 = vector.load %arg1[%c0, %c0_0] : memref<8x64xf32, #tpu.memory_space<vmem>>, vector<8x64xf32>
    %c0_1 = arith.constant 0 : index
    %c0_2 = arith.constant 0 : index
    %1 = vector.load %arg0[%c0_1, %c0_2] : memref<1x64xf32, #tpu.memory_space<vmem>>, vector<1x64xf32>
    %2 = vector.broadcast %1 : vector<1x64xf32> to vector<8x64xf32>
    %3 = arith.mulf %0, %2 : vector<8x64xf32>
    %c0_3 = arith.constant 0 : index
    %c0_4 = arith.constant 0 : index
    %4 = vector.load %arg2[%c0_3, %c0_4] : memref<64x2xf32, #tpu.memory_space<vmem>>, vector<64x2xf32>
    %cst = arith.constant dense<0.000000e+00> : vector<8x2xf32>
    %5 = tpu.matmul %3, %4, %cst {dimension_numbers = #tpu.dot_dimension_numbers<[1], [0], [0], [1], [0, 0, 1, 1], [], []>} : vector<8x64xf32>, vector<64x2xf32>, vector<8x2xf32> -> vector<8x2xf32>
    %cst_5 = arith.constant dense<0xFF800000> : vector<8xf32>
    %6 = vector.multi_reduction <maximumf>, %5, %cst_5 [1] : vector<8x2xf32> to vector<8xf32>
    %7 = vector.shape_cast %6 : vector<8xf32> to vector<8x1xf32>
    %8 = vector.broadcast %7 : vector<8x1xf32> to vector<8x2xf32>
    %9 = arith.subf %5, %8 : vector<8x2xf32>
    %10 = math.exp %9 : vector<8x2xf32>
    %cst_6 = arith.constant dense<0.000000e+00> : vector<8xf32>
    %11 = vector.multi_reduction <add>, %10, %cst_6 [1] : vector<8x2xf32> to vector<8xf32>
    %12 = vector.shape_cast %11 : vector<8xf32> to vector<8x1xf32>
    %13 = tpu.reciprocal %12 : vector<8x1xf32> -> vector<8x1xf32>
    %14 = vector.broadcast %13 : vector<8x1xf32> to vector<8x2xf32>
    %15 = arith.mulf %10, %14 : vector<8x2xf32>
    %c0_7 = arith.constant 0 : index
    %c0_8 = arith.constant 0 : index
    %16 = vector.load %arg3[%c0_7, %c0_8] : memref<8x2xf32, #tpu.memory_space<vmem>>, vector<8x2xf32>
    tpu.vector_store %arg3[%c0_7, %c0_8], %15 {strides = array<i32>} : memref<8x2xf32, #tpu.memory_space<vmem>>, vector<8x2xf32>,
    return
  }
}

</mosaic_0001>

<llo_original>
// kernel: tpu_custom_call.1
$region0: #{tpu_custom_call.1}
  #allocation0 [shape = 'u32[]', space=smem, size = 0x4, offset = 0x4, fixed_abs, tag = 'smem constant byte address 0x4 - core index']
  #allocation1 [shape = 'u32[144,128]{1,0:T(1,128)}', space=vmem, size = 0x12000, scoped, tag = 'internal scratch']
  %s0 = inlined_call_operand.vmem [shape: f32[1,64], index: 0, kind: input, shape index: {}]
  %s1 = inlined_call_operand.vmem [shape: f32[8,64], index: 1, kind: input, shape index: {}]
  %s2 = inlined_call_operand.vmem [shape: f32[64,2], index: 2, kind: input, shape index: {}]
  %s3 = inlined_call_operand.vmem [shape: f32[8,2], index: 3, kind: output, shape index: {}]
  %s4 = sld [smem:[#allocation0]]
  $region22: #{tpu_custom_call.1} parent=0
    _
  %s6 = ssub.s32 1, %s4
  %s7 = scalar_select 0, %s6, %s4
  // Predicated region
  $region2: #{tpu_custom_call.1} parent=0 // pred_check
    _
  $region3: #{tpu_custom_call.1} parent=0 // pred_check_branch
    %9 = sbr.rel (0) target = $region5
  $region4: #{tpu_custom_call.1} parent=0 // pred_region
    _
  $region5: #{tpu_custom_call.1} parent=0 // pred_fallthru
    _
  // Predicated region
  $region6: #{tpu_custom_call.1} parent=0 // pred_check
    _
  $region7: #{tpu_custom_call.1} parent=0 // pred_check_branch
    %11 = sbr.rel (0) target = $region9
  $region8: #{tpu_custom_call.1} parent=0 // pred_region
    _
  $region9: #{tpu_custom_call.1} parent=0 // pred_fallthru
    _
  // Predicated region
  $region10: #{tpu_custom_call.1} parent=0 // pred_check
    _
  $region11: #{tpu_custom_call.1} parent=0 // pred_check_branch
    %13 = sbr.rel (0) target = $region13
  $region12: #{tpu_custom_call.1} parent=0 // pred_region
    _
  $region13: #{tpu_custom_call.1} parent=0 // pred_fallthru
    _
  %v14 = vld [vmem:[%s1] sm:$0xff]
  %v15 = vld [vmem:[%s0] sm:$0x1]
  %v17 = vlaneseq
  %v18 = vshrl.u32 %v17, 7
  %v19 = vsub.s32 0, %v18
  %v20 = vrot.slane %v15, %v19
  %v22 = vmul.f32 %v14, %v20
  %v23 = vld [vmem:[%s2] sm:$0xff]
  %v24 = vld [vmem:[%s2 + $0x8] sm:$0xff]
  %v25 = vld [vmem:[%s2 + $0x10] sm:$0xff]
  %v26 = vld [vmem:[%s2 + $0x18] sm:$0xff]
  %v27 = vld [vmem:[%s2 + $0x20] sm:$0xff]
  %v28 = vld [vmem:[%s2 + $0x28] sm:$0xff]
  %v29 = vld [vmem:[%s2 + $0x30] sm:$0xff]
  %v30 = vld [vmem:[%s2 + $0x38] sm:$0xff]
  %vm31 = vcmask 523264
  %v33 = vsel %vm31, %v22, 0
  %35 = vmatprep.subr.mxu0 0.0
  %36 = vmatpush1.msra.mxu0 0.0
  %37 = vmatprep.subr.mxu0 0.0
  %38 = vmatpush1.msra.mxu0 0.0
  %39 = vmatprep.subr.mxu0 0.0
  %40 = vmatpush1.msra.mxu0 0.0
  %41 = vmatprep.subr.mxu0 0.0
  %42 = vmatpush1.msra.mxu0 0.0
  %43 = vmatprep.subr.mxu0 0.0
  %44 = vmatpush1.msra.mxu0 0.0
  %45 = vmatprep.subr.mxu0 0.0
  %46 = vmatpush1.msra.mxu0 0.0
  %47 = vmatprep.subr.mxu0 0.0
  %48 = vmatpush1.msra.mxu0 0.0
  %49 = vmatprep.subr.mxu0 0.0
  %50 = vmatpush1.msra.mxu0 0.0
  %51 = vmatprep.subr.mxu0 0.0
  %52 = vmatpush1.msra.mxu0 %v30
  %53 = vmatprep.subr.mxu0 0.0
  %54 = vmatpush1.msra.mxu0 %v29
  %55 = vmatprep.subr.mxu0 0.0
  %56 = vmatpush1.msra.mxu0 %v28
  %57 = vmatprep.subr.mxu0 0.0
  %58 = vmatpush1.msra.mxu0 %v27
  %59 = vmatprep.subr.mxu0 0.0
  %60 = vmatpush1.msra.mxu0 %v26
  %61 = vmatprep.subr.mxu0 0.0
  %62 = vmatpush1.msra.mxu0 %v25
  %63 = vmatprep.subr.mxu0 0.0
  %64 = vmatpush1.msra.mxu0 %v24
  %65 = vmatprep.subr.mxu0 0.0
  %66 = vmatpush1.msra.mxu0 %v23
  %67 = vmatprep.subr.mxu0 0.0
  %68 = vmatpush2.msra.mxu0 0.0
  %69 = vmatprep.subr.mxu0 0.0
  %70 = vmatpush2.msra.mxu0 0.0
  %71 = vmatprep.subr.mxu0 0.0
  %72 = vmatpush2.msra.mxu0 0.0
  %73 = vmatprep.subr.mxu0 0.0
  %74 = vmatpush2.msra.mxu0 0.0
  %75 = vmatprep.subr.mxu0 0.0
  %76 = vmatpush2.msra.mxu0 0.0
  %77 = vmatprep.subr.mxu0 0.0
  %78 = vmatpush2.msra.mxu0 0.0
  %79 = vmatprep.subr.mxu0 0.0
  %80 = vmatpush2.msra.mxu0 0.0
  %81 = vmatprep.subr.mxu0 0.0
  %82 = vmatpush2.msra.mxu0 0.0
  %83 = vmatprep.subr.mxu0 0.0
  %84 = vmatpush2.msra.mxu0 0.0
  %85 = vmatprep.subr.mxu0 0.0
  %86 = vmatpush2.msra.mxu0 0.0
  %87 = vmatprep.subr.mxu0 0.0
  %88 = vmatpush2.msra.mxu0 0.0
  %89 = vmatprep.subr.mxu0 0.0
  %90 = vmatpush2.msra.mxu0 0.0
  %91 = vmatprep.subr.mxu0 0.0
  %92 = vmatpush2.msra.mxu0 0.0
  %93 = vmatprep.subr.mxu0 0.0
  %94 = vmatpush2.msra.mxu0 0.0
  %95 = vmatprep.subr.mxu0 0.0
  %96 = vmatpush2.msra.mxu0 0.0
  %97 = vmatprep.subr.mxu0 0.0
  %98 = vmatpush2.msra.mxu0 0.0
  %99 = vmatprep.mubr.f32.mxu0 0.0
  %100 = vmatmul.mubr.f32.gmra.mxu0 %v33
  %v101 = vpop.f32.mrf.mxu0
  %v102 = vadd.f32 0.0, %v101
  %v103 = vpop.f32.mrf.mxu0
  %104 = vdwg.mxu0
  %vm105 = vcmask 15360
  %v106 = vsel %vm105, %v102, -inf
  %107 = vmax.xlane.f32.xlu0 %v106
  %v108 = vpop.xlane.xlu0 %107
  %v109 = vsub.f32 %v102, %v108
  %v110 = vmul.f32 %v109, 1.442695
  %v111 = vpow.pop %v110
  %v112 = vsel %vm105, %v111, 0.0
  %113 = vadd.xlane.f32.xlu0 %v112
  %v114 = vpop.xlane.xlu0 %113
  %v115 = vrcp.pop %v114
  %v116 = vmul.f32 %v111, %v115
  %117 = vst.msk [vmem:[%s3] sm:$0xff] %vm105, %v116
  // Predicated region
  $region14: #{tpu_custom_call.1} parent=0 // pred_check
    _
  $region15: #{tpu_custom_call.1} parent=0 // pred_check_branch
    %119 = sbr.rel (0) target = $region17
  $region16: #{tpu_custom_call.1} parent=0 // pred_region
    _
  $region17: #{tpu_custom_call.1} parent=0 // pred_fallthru
    _
  // Predicated region
  $region18: #{tpu_custom_call.1} parent=0 // pred_check
    _
  $region19: #{tpu_custom_call.1} parent=0 // pred_check_branch
    %121 = sbr.rel (0) target = $region21
  $region20: #{tpu_custom_call.1} parent=0 // pred_region
    _
  $region21: #{tpu_custom_call.1} parent=0 // pred_fallthru
    _

</llo_original>
